<compile_context>
chip_gen: v5e
topology: v5e:2x2
jax: 0.10.0
libtpu: 0.0.40
codegen_flags: <defaults>
</compile_context>

<pallas_src>
import functools

import jax
import jax.numpy as jnp
from jax.experimental import pallas as pl
from jax.experimental.pallas import tpu as pltpu


def gen_layer_kernel(x_ref, ea_ref, src_ref, dst_ref,
                     w_src_ref, w_dst_ref, w_e_ref,
                     w1_ref, b1_ref, w2_ref, ln_g_ref, ln_b_ref,
                     out_ref, hsrc_sc, m_sc, acc_sc):
    et = pl.program_id(0)
    last = pl.num_programs(0) - 1
    N, D = out_ref.shape

    # ---- init (first edge tile): source projection (bf16 resident) + zero acc ----
    @pl.when(et == 0)
    def _init():
        hsrc_sc[...] = jnp.dot(x_ref[...], w_src_ref[...],
                               preferred_element_type=jnp.float32
                               ).astype(jnp.bfloat16)
        m_sc[...] = jnp.full_like(m_sc, -jnp.inf)
        acc_sc[...] = jnp.zeros_like(acc_sc)

    # ---- per-tile one-hots built in-register from int32 index vectors ----
    # [1, N] lane iota; the == broadcasts against the [tE, 1] index columns.
    node_iota = jax.lax.broadcasted_iota(jnp.int32, (1, N), 1)
    src_oh = (src_ref[...] == node_iota).astype(jnp.bfloat16)      # [tE, N]
    dst_oh = (dst_ref[...] == node_iota).astype(jnp.bfloat16)      # [tE, N]
    # (padded edges carry index == N -> all-zero rows -> no contribution)

    # ---- edge projection on the VPU (edge_dim is tiny; avoid K=2 MXU matmul) ----
    ea = ea_ref[...]                                               # [tE, edge_dim]
    w_e = w_e_ref[...]                                             # [edge_dim, D]
    e_t = ea[:, 0:1] * w_e[0:1, :]
    for c in range(1, ea.shape[1]):
        e_t = e_t + ea[:, c:c + 1] * w_e[c:c + 1, :]               # [tE, D] f32

    # ---- message (bf16 MXU gather, f32 accumulation / VPU math) ----
    gathered = jnp.dot(src_oh, hsrc_sc[...],
                       preferred_element_type=jnp.float32)         # [tE, D]
    msg = jnp.maximum(gathered + e_t, 0.0) + 1e-7                  # [tE, D] f32

    # ---- online per-channel max (valid shift for every destination group) ----
    m_old = m_sc[...]                                              # [1, D]
    tile_max = jnp.max(msg, axis=0, keepdims=True)                 # [1, D]
    m_new = jnp.maximum(m_old, tile_max)
    alpha_un = jnp.exp(msg - m_new)                                # [tE, D] f32

    # ---- fused num/den scatter: one bf16 MXU pass -> [N, 2D] f32 ----
    rhs = jnp.concatenate([alpha_un * msg, alpha_un],
                          axis=1).astype(jnp.bfloat16)             # [tE, 2D]
    dn = (((0,), (0,)), ((), ()))
    acc_t = jax.lax.dot_general(dst_oh, rhs, dn,
                                preferred_element_type=jnp.float32)  # [N, 2D]

    # Rescale existing accumulator only when the global max actually increased
    # (exp(m_old - m_new) == 1 everywhere otherwise, so skipping is exact).
    @pl.when(jnp.max(tile_max - m_old) > 0.0)
    def _rescale():
        r = jnp.exp(m_old - m_new)                                 # [1, D]
        acc_sc[...] = acc_sc[...] * jnp.concatenate([r, r], axis=1)

    acc_sc[...] = acc_sc[...] + acc_t
    m_sc[...] = m_new

    # ---- finalize (last edge tile): aggregate / lin_dst / MLP / LayerNorm / ELU ----
    @pl.when(et == last)
    def _finalize():
        acc = acc_sc[...]                                          # [N, 2D]
        num = acc[:, :D]
        den = acc[:, D:]
        # zero in-degree nodes: num == den == 0 -> aggr == 0 (eps keeps it finite)
        aggr = num * pl.reciprocal(den + 1e-16, approx=True)
        h = aggr + jnp.dot(x_ref[...], w_dst_ref[...],
                           preferred_element_type=jnp.float32)     # residual lin_dst
        # Linear(D,2D) with eval-mode BN folded in -> ReLU -> Linear(2D,D)
        h1 = jnp.dot(h, w1_ref[...],
                     preferred_element_type=jnp.float32) + b1_ref[...]
        h1 = jnp.maximum(h1, 0.0)
        h2 = jnp.dot(h1, w2_ref[...], preferred_element_type=jnp.float32)
        # LayerNorm over the feature dim (rsqrt on the EUP)
        mu = jnp.mean(h2, axis=-1, keepdims=True)
        cen = h2 - mu
        var = jnp.mean(cen * cen, axis=-1, keepdims=True)
        hn = cen * jax.lax.rsqrt(var + 1e-5)
        hn = hn * ln_g_ref[...] + ln_b_ref[...]
        # ELU(alpha=1); Dropout(0.2) eval-mode identity
        out_ref[...] = jnp.where(hn > 0.0, hn, jnp.exp(hn) - 1.0)


def multi_head_gen_layer(x, edge_index, edge_attr, params, *, edge_tile=512):
    N, in_dim = x.shape
    E = edge_index.shape[1]
    edge_dim = edge_attr.shape[1]
    D = params["w_src"].shape[1]

    # Eval-mode BN folded into layer-1 weights / bias.
    w1_eff = params["w1"] * params["bn_scale"]                       # [D, 2D]
    b1_eff = params["bn_shift"]                                      # [1, 2D]

    # Pad the edge list to a multiple of the edge tile; padded edges point at
    # node id == N (out of range) so their one-hot rows are all-zero, and their
    # padded msg (== 1e-7) never exceeds any real msg (all >= 1e-7).
    edge_tile = max(8, min(((edge_tile + 7) // 8) * 8, ((E + 7) // 8) * 8))
    e_pad = ((E + edge_tile - 1) // edge_tile) * edge_tile
    pad = e_pad - E
    src = jnp.concatenate([edge_index[0].astype(jnp.int32),
                           jnp.full((pad,), N, jnp.int32)])[:, None]  # [E_pad, 1]
    dst = jnp.concatenate([edge_index[1].astype(jnp.int32),
                           jnp.full((pad,), N, jnp.int32)])[:, None]  # [E_pad, 1]
    ea = jnp.concatenate([edge_attr.astype(jnp.float32),
                          jnp.zeros((pad, edge_dim), jnp.float32)], axis=0)

    n_et = e_pad // edge_tile

    grid_spec = pltpu.PrefetchScalarGridSpec(
        num_scalar_prefetch=0,
        grid=(n_et,),
        in_specs=[
            pl.BlockSpec((N, in_dim), lambda e: (0, 0)),             # x (resident)
            pl.BlockSpec((edge_tile, edge_dim), lambda e: (e, 0)),   # edge_attr tile
            pl.BlockSpec((edge_tile, 1), lambda e: (e, 0)),          # src indices
            pl.BlockSpec((edge_tile, 1), lambda e: (e, 0)),          # dst indices
            pl.BlockSpec((in_dim, D), lambda e: (0, 0)),             # W_src
            pl.BlockSpec((in_dim, D), lambda e: (0, 0)),             # W_dst
            pl.BlockSpec((edge_dim, D), lambda e: (0, 0)),           # W_edge
            pl.BlockSpec((D, 2 * D), lambda e: (0, 0)),              # W1 (BN folded)
            pl.BlockSpec((1, 2 * D), lambda e: (0, 0)),              # b1 (BN shift)
            pl.BlockSpec((2 * D, D), lambda e: (0, 0)),              # W2
            pl.BlockSpec((1, D), lambda e: (0, 0)),                  # LN gamma
            pl.BlockSpec((1, D), lambda e: (0, 0)),                  # LN beta
        ],
        out_specs=pl.BlockSpec((N, D), lambda e: (0, 0)),
        scratch_shapes=[
            pltpu.VMEM((N, D), jnp.bfloat16),     # h_src (x @ W_src), bf16 resident
            pltpu.VMEM((1, D), jnp.float32),      # running per-channel max
            pltpu.VMEM((N, 2 * D), jnp.float32),  # fused [num | den] accumulator
        ],
    )

    return pl.pallas_call(
        gen_layer_kernel,
        out_shape=jax.ShapeDtypeStruct((N, D), jnp.float32),
        grid_spec=grid_spec,
        compiler_params=pltpu.CompilerParams(
            dimension_semantics=("arbitrary",),   # edge axis is a reduction
            vmem_limit_bytes=48 * 1024 * 1024,    # fits v7x's 64 MiB physical VMEM
        ),
    )(x.astype(jnp.float32), ea, src, dst,
      params["w_src"], params["w_dst"], params["w_edge"],
      w1_eff, b1_eff, params["w2"],
      params["ln_gamma"], params["ln_beta"])


def make_params(key, in_dim, out_dim, edge_dim):
    ks = jax.random.split(key, 5)

    def glorot(k, shape):
        fan_in, fan_out = shape
        lim = (6.0 / (fan_in + fan_out)) ** 0.5
        return jax.random.uniform(k, shape, jnp.float32, -lim, lim)

    D = out_dim
    params = {
        "w_src": glorot(ks[0], (in_dim, D)),
        "w_edge": glorot(ks[1], (edge_dim, D)),
        "w_dst": glorot(ks[2], (in_dim, D)),
        "w1": glorot(ks[3], (D, 2 * D)),
        "w2": glorot(ks[4], (2 * D, D)),
    }
    # BatchNorm1d(2D) eval-mode with default state: mean=0, var=1, gamma=1, beta=0.
    bn_eps = 1e-5
    gamma = jnp.ones((1, 2 * D), jnp.float32)
    beta = jnp.zeros((1, 2 * D), jnp.float32)
    running_mean = jnp.zeros((1, 2 * D), jnp.float32)
    running_var = jnp.ones((1, 2 * D), jnp.float32)
    scale = gamma / jnp.sqrt(running_var + bn_eps)
    params["bn_scale"] = scale
    params["bn_shift"] = beta - running_mean * scale
    # LayerNorm(out_dim) default init.
    params["ln_gamma"] = jnp.ones((1, D), jnp.float32)
    params["ln_beta"] = jnp.zeros((1, D), jnp.float32)
    return params


def reference_forward(x, edge_index, edge_attr, p):
    """Pure-JAX reference with identical module semantics."""
    src, dst = edge_index[0], edge_index[1]
    N = x.shape[0]
    h_src = x @ p["w_src"]
    h_dst = x @ p["w_dst"]
    e = edge_attr @ p["w_edge"]
    msg = jnp.maximum(h_src[src] + e, 0.0) + 1e-7
    m = jnp.max(msg, axis=0, keepdims=True)           # softmax shift-invariant
    a = jnp.exp(msg - m)
    oh = jax.nn.one_hot(dst, N, dtype=jnp.float32)    # [E, N]
    den = oh.T @ a
    num = oh.T @ (a * msg)
    aggr = num / (den + 1e-16)
    h = aggr + h_dst
    h1 = h @ p["w1"]
    h1 = h1 * p["bn_scale"] + p["bn_shift"]
    h1 = jnp.maximum(h1, 0.0)
    h2 = h1 @ p["w2"]
    mu = h2.mean(-1, keepdims=True)
    var = ((h2 - mu) ** 2).mean(-1, keepdims=True)
    hn = (h2 - mu) / jnp.sqrt(var + 1e-5)
    hn = hn * p["ln_gamma"] + p["ln_beta"]
    return jnp.where(hn > 0, hn, jnp.exp(hn) - 1.0)


if __name__ == "__main__":
    in_dim, out_dim, edge_dim = 4, 32, 2
    N, E = 8, 16

    key = jax.random.PRNGKey(0)
    k_x, k_ei_src, k_ei_dst, k_ea, k_p = jax.random.split(key, 5)

    x = jax.random.normal(k_x, (N, in_dim), jnp.float32)
    edge_index = jnp.stack([
        jax.random.randint(k_ei_src, (E,), 0, N),
        jax.random.randint(k_ei_dst, (E,), 0, N),
    ], axis=0).astype(jnp.int32)                       # [2, E]
    edge_attr = jax.random.normal(k_ea, (E, edge_dim), jnp.float32)

    params = make_params(k_p, in_dim, out_dim, edge_dim)

    # edge_tile=8 -> 2 edge tiles, exercising cross-tile online accumulation and
    # the guarded accumulator rescale.
    fn = functools.partial(multi_head_gen_layer, edge_tile=8)
    out = fn(x, edge_index, edge_attr, params)
    jax.block_until_ready(out)

    assert out.shape == (N, out_dim) and out.dtype == jnp.float32
    assert bool(jnp.all(jnp.isfinite(out)))
    ref = reference_forward(x, edge_index, edge_attr, params)
    assert bool(jnp.allclose(out, ref, rtol=5e-2, atol=5e-2))
    print("KERNEL_OK")
</pallas_src>

<mosaic_0001>
module attributes {stable_mosaic.version = 11 : i64} {
  func.func @gen_layer_kernel(%arg0: i32, %arg1: memref<8x4xf32, #tpu.memory_space<vmem>>, %arg2: memref<8x2xf32, #tpu.memory_space<vmem>>, %arg3: memref<8x1xi32, #tpu.memory_space<vmem>>, %arg4: memref<8x1xi32, #tpu.memory_space<vmem>>, %arg5: memref<4x32xf32, #tpu.memory_space<vmem>>, %arg6: memref<4x32xf32, #tpu.memory_space<vmem>>, %arg7: memref<2x32xf32, #tpu.memory_space<vmem>>, %arg8: memref<32x64xf32, #tpu.memory_space<vmem>>, %arg9: memref<1x64xf32, #tpu.memory_space<vmem>>, %arg10: memref<64x32xf32, #tpu.memory_space<vmem>>, %arg11: memref<1x32xf32, #tpu.memory_space<vmem>>, %arg12: memref<1x32xf32, #tpu.memory_space<vmem>>, %arg13: memref<8x32xf32, #tpu.memory_space<vmem>>, %arg14: memref<8x32xbf16, #tpu.memory_space<vmem>>, %arg15: memref<1x32xf32, #tpu.memory_space<vmem>>, %arg16: memref<8x64xf32, #tpu.memory_space<vmem>>) attributes {dimension_semantics = [#tpu.dimension_semantics<arbitrary>], iteration_bounds = array<i64: 2>, scalar_prefetch = 0 : i64, scratch_operands = 3 : i64, tpu.core_type = #tpu.core_type<tc>, window_params = [{pipeline_mode = #tpu.pipeline_mode<synchronous>, transform_indices = @transform_0, window_bounds = array<i64: 8, 4>}, {transform_indices = @transform_1, window_bounds = array<i64: 8, 2>}, {transform_indices = @transform_2, window_bounds = array<i64: 8, 1>}, {transform_indices = @transform_3, window_bounds = array<i64: 8, 1>}, {pipeline_mode = #tpu.pipeline_mode<synchronous>, transform_indices = @transform_4, window_bounds = array<i64: 4, 32>}, {pipeline_mode = #tpu.pipeline_mode<synchronous>, transform_indices = @transform_5, window_bounds = array<i64: 4, 32>}, {pipeline_mode = #tpu.pipeline_mode<synchronous>, transform_indices = @transform_6, window_bounds = array<i64: 2, 32>}, {pipeline_mode = #tpu.pipeline_mode<synchronous>, transform_indices = @transform_7, window_bounds = array<i64: 32, 64>}, {pipeline_mode = #tpu.pipeline_mode<synchronous>, transform_indices = @transform_8, window_bounds = array<i64: 1, 64>}, {pipeline_mode = #tpu.pipeline_mode<synchronous>, transform_indices = @transform_9, window_bounds = array<i64: 64, 32>}, {pipeline_mode = #tpu.pipeline_mode<synchronous>, transform_indices = @transform_10, window_bounds = array<i64: 1, 32>}, {pipeline_mode = #tpu.pipeline_mode<synchronous>, transform_indices = @transform_11, window_bounds = array<i64: 1, 32>}, {pipeline_mode = #tpu.pipeline_mode<synchronous>, transform_indices = @transform_12, window_bounds = array<i64: 8, 32>}]} {
    %c0_i32 = arith.constant 0 : i32
    %0 = arith.cmpi eq, %arg0, %c0_i32 : i32
    %1 = arith.extui %0 : i1 to i32
    %c0_i32_0 = arith.constant 0 : i32
    %2 = arith.cmpi ne, %1, %c0_i32_0 : i32
    scf.if %2 {
      %c0_26 = arith.constant 0 : index
      %c0_27 = arith.constant 0 : index
      %64 = vector.load %arg1[%c0_26, %c0_27] : memref<8x4xf32, #tpu.memory_space<vmem>>, vector<8x4xf32>
      %c0_28 = arith.constant 0 : index
      %c0_29 = arith.constant 0 : index
      %65 = vector.load %arg5[%c0_28, %c0_29] : memref<4x32xf32, #tpu.memory_space<vmem>>, vector<4x32xf32>
      %cst_30 = arith.constant dense<0.000000e+00> : vector<8x32xf32>
      %66 = tpu.matmul %64, %65, %cst_30 {dimension_numbers = #tpu.dot_dimension_numbers<[1], [0], [0], [1], [0, 0, 1, 1], [], []>} : vector<8x4xf32>, vector<4x32xf32>, vector<8x32xf32> -> vector<8x32xf32>
      %67 = arith.truncf %66 : vector<8x32xf32> to vector<8x32xbf16>
      %c0_31 = arith.constant 0 : index
      %c0_32 = arith.constant 0 : index
      %68 = vector.load %arg14[%c0_31, %c0_32] : memref<8x32xbf16, #tpu.memory_space<vmem>>, vector<8x32xbf16>
      tpu.vector_store %arg14[%c0_31, %c0_32], %67 {strides = array<i32>} : memref<8x32xbf16, #tpu.memory_space<vmem>>, vector<8x32xbf16>,
      %cst_33 = arith.constant 0xFF800000 : f32
      %69 = vector.broadcast %cst_33 : f32 to vector<1x32xf32>
      %c0_34 = arith.constant 0 : index
      %c0_35 = arith.constant 0 : index
      %70 = vector.load %arg15[%c0_34, %c0_35] : memref<1x32xf32, #tpu.memory_space<vmem>>, vector<1x32xf32>
      tpu.vector_store %arg15[%c0_34, %c0_35], %69 {strides = array<i32>} : memref<1x32xf32, #tpu.memory_space<vmem>>, vector<1x32xf32>,
      %cst_36 = arith.constant 0.000000e+00 : f32
      %71 = vector.broadcast %cst_36 : f32 to vector<8x64xf32>
      %c0_37 = arith.constant 0 : index
      %c0_38 = arith.constant 0 : index
      %72 = vector.load %arg16[%c0_37, %c0_38] : memref<8x64xf32, #tpu.memory_space<vmem>>, vector<8x64xf32>
      tpu.vector_store %arg16[%c0_37, %c0_38], %71 {strides = array<i32>} : memref<8x64xf32, #tpu.memory_space<vmem>>, vector<8x64xf32>,
    } else {
    }
    %3 = tpu.iota {dimensions = array<i32: 1>} : vector<1x8xi32>
    %c0 = arith.constant 0 : index
    %c0_1 = arith.constant 0 : index
    %4 = vector.load %arg3[%c0, %c0_1] : memref<8x1xi32, #tpu.memory_space<vmem>>, vector<8x1xi32>
    %5 = vector.broadcast %4 : vector<8x1xi32> to vector<8x8xi32>
    %6 = vector.broadcast %3 : vector<1x8xi32> to vector<8x8xi32>
    %7 = arith.cmpi eq, %5, %6 : vector<8x8xi32>
    %8 = arith.extui %7 : vector<8x8xi1> to vector<8x8xi32>
    %9 = arith.sitofp %8 : vector<8x8xi32> to vector<8x8xf32>
    %10 = arith.truncf %9 : vector<8x8xf32> to vector<8x8xbf16>
    %c0_2 = arith.constant 0 : index
    %c0_3 = arith.constant 0 : index
    %11 = vector.load %arg4[%c0_2, %c0_3] : memref<8x1xi32, #tpu.memory_space<vmem>>, vector<8x1xi32>
    %12 = vector.broadcast %11 : vector<8x1xi32> to vector<8x8xi32>
    %13 = vector.broadcast %3 : vector<1x8xi32> to vector<8x8xi32>
    %14 = arith.cmpi eq, %12, %13 : vector<8x8xi32>
    %15 = arith.extui %14 : vector<8x8xi1> to vector<8x8xi32>
    %16 = arith.sitofp %15 : vector<8x8xi32> to vector<8x8xf32>
    %17 = arith.truncf %16 : vector<8x8xf32> to vector<8x8xbf16>
    %c0_4 = arith.constant 0 : index
    %c0_5 = arith.constant 0 : index
    %18 = vector.load %arg2[%c0_4, %c0_5] : memref<8x2xf32, #tpu.memory_space<vmem>>, vector<8x2xf32>
    %c0_6 = arith.constant 0 : index
    %c0_7 = arith.constant 0 : index
    %19 = vector.load %arg7[%c0_6, %c0_7] : memref<2x32xf32, #tpu.memory_space<vmem>>, vector<2x32xf32>
    %20 = vector.extract_strided_slice %18 {offsets = [0, 0], sizes = [8, 1], strides = [1, 1]} : vector<8x2xf32> to vector<8x1xf32>
    %21 = vector.extract_strided_slice %19 {offsets = [0, 0], sizes = [1, 32], strides = [1, 1]} : vector<2x32xf32> to vector<1x32xf32>
    %22 = vector.broadcast %20 : vector<8x1xf32> to vector<8x32xf32>
    %23 = vector.broadcast %21 : vector<1x32xf32> to vector<8x32xf32>
    %24 = arith.mulf %22, %23 : vector<8x32xf32>
    %25 = vector.extract_strided_slice %18 {offsets = [0, 1], sizes = [8, 1], strides = [1, 1]} : vector<8x2xf32> to vector<8x1xf32>
    %26 = vector.extract_strided_slice %19 {offsets = [1, 0], sizes = [1, 32], strides = [1, 1]} : vector<2x32xf32> to vector<1x32xf32>
    %27 = vector.broadcast %25 : vector<8x1xf32> to vector<8x32xf32>
    %28 = vector.broadcast %26 : vector<1x32xf32> to vector<8x32xf32>
    %29 = arith.mulf %27, %28 : vector<8x32xf32>
    %30 = arith.addf %24, %29 : vector<8x32xf32>
    %c0_8 = arith.constant 0 : index
    %c0_9 = arith.constant 0 : index
    %31 = vector.load %arg14[%c0_8, %c0_9] : memref<8x32xbf16, #tpu.memory_space<vmem>>, vector<8x32xbf16>
    %cst = arith.constant dense<0.000000e+00> : vector<8x32xf32>
    %32 = tpu.matmul %10, %31, %cst {dimension_numbers = #tpu.dot_dimension_numbers<[1], [0], [0], [1], [0, 0, 1, 1], [], []>} : vector<8x8xbf16>, vector<8x32xbf16>, vector<8x32xf32> -> vector<8x32xf32>
    %33 = arith.addf %32, %30 : vector<8x32xf32>
    %cst_10 = arith.constant 0.000000e+00 : f32
    %34 = vector.broadcast %cst_10 : f32 to vector<8x32xf32>
    %35 = arith.maximumf %33, %34 : vector<8x32xf32>
    %cst_11 = arith.constant 1.000000e-07 : f32
    %36 = vector.broadcast %cst_11 : f32 to vector<8x32xf32>
    %37 = arith.addf %35, %36 : vector<8x32xf32>
    %c0_12 = arith.constant 0 : index
    %c0_13 = arith.constant 0 : index
    %38 = vector.load %arg15[%c0_12, %c0_13] : memref<1x32xf32, #tpu.memory_space<vmem>>, vector<1x32xf32>
    %cst_14 = arith.constant dense<0xFF800000> : vector<32xf32>
    %39 = vector.multi_reduction <maximumf>, %37, %cst_14 [0] : vector<8x32xf32> to vector<32xf32>
    %40 = vector.shape_cast %39 : vector<32xf32> to vector<1x32xf32>
    %41 = arith.maximumf %38, %40 : vector<1x32xf32>
    %42 = vector.broadcast %41 : vector<1x32xf32> to vector<8x32xf32>
    %43 = arith.subf %37, %42 : vector<8x32xf32>
    %44 = math.exp %43 : vector<8x32xf32>
    %45 = arith.mulf %44, %37 : vector<8x32xf32>
    %46 = tpu.concatenate %45, %44 in 1 : vector<8x32xf32>, vector<8x32xf32> -> vector<8x64xf32>
    %47 = arith.truncf %46 : vector<8x64xf32> to vector<8x64xbf16>
    %cst_15 = arith.constant dense<0.000000e+00> : vector<8x64xf32>
    %48 = tpu.matmul %17, %47, %cst_15 {dimension_numbers = #tpu.dot_dimension_numbers<[0], [0], [1], [1], [0, 1, 1, 1], [], []>} : vector<8x8xbf16>, vector<8x64xbf16>, vector<8x64xf32> -> vector<8x64xf32>
    %49 = arith.subf %40, %38 : vector<1x32xf32>
    %50 = vector.shape_cast %49 : vector<1x32xf32> to vector<1x1x32xf32>
    %cst_16 = arith.constant dense<0xFF800000> : vector<1xf32>
    %51 = vector.multi_reduction <maximumf>, %50, %cst_16 [1, 2] : vector<1x1x32xf32> to vector<1xf32>
    %52 = vector.shape_cast %51 : vector<1xf32> to vector<1x1x1xf32>
    %53 = vector.extract %52[0, 0, 0] : f32 from vector<1x1x1xf32>
    %cst_17 = arith.constant 0.000000e+00 : f32
    %54 = arith.cmpf ogt, %53, %cst_17 : f32
    %55 = arith.extui %54 : i1 to i32
    %c0_i32_18 = arith.constant 0 : i32
    %56 = arith.cmpi ne, %55, %c0_i32_18 : i32
    scf.if %56 {
      %64 = arith.subf %38, %41 : vector<1x32xf32>
      %65 = math.exp %64 : vector<1x32xf32>
      %c0_26 = arith.constant 0 : index
      %c0_27 = arith.constant 0 : index
      %66 = vector.load %arg16[%c0_26, %c0_27] : memref<8x64xf32, #tpu.memory_space<vmem>>, vector<8x64xf32>
      %67 = tpu.concatenate %65, %65 in 1 : vector<1x32xf32>, vector<1x32xf32> -> vector<1x64xf32>
      %68 = vector.broadcast %67 : vector<1x64xf32> to vector<8x64xf32>
      %69 = arith.mulf %66, %68 : vector<8x64xf32>
      %c0_28 = arith.constant 0 : index
      %c0_29 = arith.constant 0 : index
      %70 = vector.load %arg16[%c0_28, %c0_29] : memref<8x64xf32, #tpu.memory_space<vmem>>, vector<8x64xf32>
      tpu.vector_store %arg16[%c0_28, %c0_29], %69 {strides = array<i32>} : memref<8x64xf32, #tpu.memory_space<vmem>>, vector<8x64xf32>,
    } else {
    }
    %c0_19 = arith.constant 0 : index
    %c0_20 = arith.constant 0 : index
    %57 = vector.load %arg16[%c0_19, %c0_20] : memref<8x64xf32, #tpu.memory_space<vmem>>, vector<8x64xf32>
    %58 = arith.addf %57, %48 : vector<8x64xf32>
    %c0_21 = arith.constant 0 : index
    %c0_22 = arith.constant 0 : index
    %59 = vector.load %arg16[%c0_21, %c0_22] : memref<8x64xf32, #tpu.memory_space<vmem>>, vector<8x64xf32>
    tpu.vector_store %arg16[%c0_21, %c0_22], %58 {strides = array<i32>} : memref<8x64xf32, #tpu.memory_space<vmem>>, vector<8x64xf32>,
    %c0_23 = arith.constant 0 : index
    %c0_24 = arith.constant 0 : index
    %60 = vector.load %arg15[%c0_23, %c0_24] : memref<1x32xf32, #tpu.memory_space<vmem>>, vector<1x32xf32>
    tpu.vector_store %arg15[%c0_23, %c0_24], %41 {strides = array<i32>} : memref<1x32xf32, #tpu.memory_space<vmem>>, vector<1x32xf32>,
    %c1_i32 = arith.constant 1 : i32
    %61 = arith.cmpi eq, %arg0, %c1_i32 : i32
    %62 = arith.extui %61 : i1 to i32
    %c0_i32_25 = arith.constant 0 : i32
    %63 = arith.cmpi ne, %62, %c0_i32_25 : i32
    scf.if %63 {
      %c0_26 = arith.constant 0 : index
      %c0_27 = arith.constant 0 : index
      %64 = vector.load %arg16[%c0_26, %c0_27] : memref<8x64xf32, #tpu.memory_space<vmem>>, vector<8x64xf32>
      %65 = vector.extract_strided_slice %64 {offsets = [0, 0], sizes = [8, 32], strides = [1, 1]} : vector<8x64xf32> to vector<8x32xf32>
      %66 = vector.extract_strided_slice %64 {offsets = [0, 32], sizes = [8, 32], strides = [1, 1]} : vector<8x64xf32> to vector<8x32xf32>
      %cst_28 = arith.constant 1.000000e-16 : f32
      %67 = vector.broadcast %cst_28 : f32 to vector<8x32xf32>
      %68 = arith.addf %66, %67 : vector<8x32xf32>
      %69 = tpu.reciprocal %68 {approx = true} : vector<8x32xf32> -> vector<8x32xf32>
      %70 = arith.mulf %65, %69 : vector<8x32xf32>
      %c0_29 = arith.constant 0 : index
      %c0_30 = arith.constant 0 : index
      %71 = vector.load %arg1[%c0_29, %c0_30] : memref<8x4xf32, #tpu.memory_space<vmem>>, vector<8x4xf32>
      %c0_31 = arith.constant 0 : index
      %c0_32 = arith.constant 0 : index
      %72 = vector.load %arg6[%c0_31, %c0_32] : memref<4x32xf32, #tpu.memory_space<vmem>>, vector<4x32xf32>
      %cst_33 = arith.constant dense<0.000000e+00> : vector<8x32xf32>
      %73 = tpu.matmul %71, %72, %cst_33 {dimension_numbers = #tpu.dot_dimension_numbers<[1], [0], [0], [1], [0, 0, 1, 1], [], []>} : vector<8x4xf32>, vector<4x32xf32>, vector<8x32xf32> -> vector<8x32xf32>
      %74 = arith.addf %70, %73 : vector<8x32xf32>
      %c0_34 = arith.constant 0 : index
      %c0_35 = arith.constant 0 : index
      %75 = vector.load %arg8[%c0_34, %c0_35] : memref<32x64xf32, #tpu.memory_space<vmem>>, vector<32x64xf32>
      %cst_36 = arith.constant dense<0.000000e+00> : vector<8x64xf32>
      %76 = tpu.matmul %74, %75, %cst_36 {dimension_numbers = #tpu.dot_dimension_numbers<[1], [0], [0], [1], [0, 0, 1, 1], [], []>} : vector<8x32xf32>, vector<32x64xf32>, vector<8x64xf32> -> vector<8x64xf32>
      %c0_37 = arith.constant 0 : index
      %c0_38 = arith.constant 0 : index
      %77 = vector.load %arg9[%c0_37, %c0_38] : memref<1x64xf32, #tpu.memory_space<vmem>>, vector<1x64xf32>
      %78 = vector.broadcast %77 : vector<1x64xf32> to vector<8x64xf32>
      %79 = arith.addf %76, %78 : vector<8x64xf32>
      %cst_39 = arith.constant 0.000000e+00 : f32
      %80 = vector.broadcast %cst_39 : f32 to vector<8x64xf32>
      %81 = arith.maximumf %79, %80 : vector<8x64xf32>
      %c0_40 = arith.constant 0 : index
      %c0_41 = arith.constant 0 : index
      %82 = vector.load %arg10[%c0_40, %c0_41] : memref<64x32xf32, #tpu.memory_space<vmem>>, vector<64x32xf32>
      %cst_42 = arith.constant dense<0.000000e+00> : vector<8x32xf32>
      %83 = tpu.matmul %81, %82, %cst_42 {dimension_numbers = #tpu.dot_dimension_numbers<[1], [0], [0], [1], [0, 0, 1, 1], [], []>} : vector<8x64xf32>, vector<64x32xf32>, vector<8x32xf32> -> vector<8x32xf32>
      %cst_43 = arith.constant dense<0.000000e+00> : vector<8xf32>
      %84 = vector.multi_reduction <add>, %83, %cst_43 [1] : vector<8x32xf32> to vector<8xf32>
      %85 = vector.shape_cast %84 : vector<8xf32> to vector<8x1xf32>
      %cst_44 = arith.constant 3.200000e+01 : f32
      %86 = vector.broadcast %cst_44 : f32 to vector<8x1xf32>
      %87 = arith.divf %85, %86 : vector<8x1xf32>
      %88 = vector.broadcast %87 : vector<8x1xf32> to vector<8x32xf32>
      %89 = arith.subf %83, %88 : vector<8x32xf32>
      %90 = arith.mulf %89, %89 : vector<8x32xf32>
      %cst_45 = arith.constant dense<0.000000e+00> : vector<8xf32>
      %91 = vector.multi_reduction <add>, %90, %cst_45 [1] : vector<8x32xf32> to vector<8xf32>
      %92 = vector.shape_cast %91 : vector<8xf32> to vector<8x1xf32>
      %cst_46 = arith.constant 3.200000e+01 : f32
      %93 = vector.broadcast %cst_46 : f32 to vector<8x1xf32>
      %94 = arith.divf %92, %93 : vector<8x1xf32>
      %cst_47 = arith.constant 9.99999974E-6 : f32
      %95 = vector.broadcast %cst_47 : f32 to vector<8x1xf32>
      %96 = arith.addf %94, %95 : vector<8x1xf32>
      %97 = math.rsqrt %96 : vector<8x1xf32>
      %98 = vector.broadcast %97 : vector<8x1xf32> to vector<8x32xf32>
      %99 = arith.mulf %89, %98 : vector<8x32xf32>
      %c0_48 = arith.constant 0 : index
      %c0_49 = arith.constant 0 : index
      %100 = vector.load %arg11[%c0_48, %c0_49] : memref<1x32xf32, #tpu.memory_space<vmem>>, vector<1x32xf32>
      %101 = vector.broadcast %100 : vector<1x32xf32> to vector<8x32xf32>
      %102 = arith.mulf %99, %101 : vector<8x32xf32>
      %c0_50 = arith.constant 0 : index
      %c0_51 = arith.constant 0 : index
      %103 = vector.load %arg12[%c0_50, %c0_51] : memref<1x32xf32, #tpu.memory_space<vmem>>, vector<1x32xf32>
      %104 = vector.broadcast %103 : vector<1x32xf32> to vector<8x32xf32>
      %105 = arith.addf %102, %104 : vector<8x32xf32>
      %cst_52 = arith.constant 0.000000e+00 : f32
      %106 = vector.broadcast %cst_52 : f32 to vector<8x32xf32>
      %107 = arith.cmpf ogt, %105, %106 : vector<8x32xf32>
      %108 = math.exp %105 : vector<8x32xf32>
      %cst_53 = arith.constant 1.000000e+00 : f32
      %109 = vector.broadcast %cst_53 : f32 to vector<8x32xf32>
      %110 = arith.subf %108, %109 : vector<8x32xf32>
      %111 = arith.select %107, %105, %110 : vector<8x32xi1>, vector<8x32xf32>
      %c0_54 = arith.constant 0 : index
      %c0_55 = arith.constant 0 : index
      %112 = vector.load %arg13[%c0_54, %c0_55] : memref<8x32xf32, #tpu.memory_space<vmem>>, vector<8x32xf32>
      tpu.vector_store %arg13[%c0_54, %c0_55], %111 {strides = array<i32>} : memref<8x32xf32, #tpu.memory_space<vmem>>, vector<8x32xf32>,
    } else {
    }
    return
  }
  func.func @transform_0(%arg0: i32) -> (i32, i32) {
    %c0_i32 = arith.constant 0 : i32
    %c0_i32_0 = arith.constant 0 : i32
    %c0_i32_1 = arith.constant 0 : i32
    return %c0_i32, %c0_i32_0 : i32, i32
  }
  func.func @transform_1(%arg0: i32) -> (i32, i32) {
    %c0_i32 = arith.constant 0 : i32
    %c0_i32_0 = arith.constant 0 : i32
    return %arg0, %c0_i32 : i32, i32
  }
  func.func @transform_2(%arg0: i32) -> (i32, i32) {
    %c0_i32 = arith.constant 0 : i32
    %c0_i32_0 = arith.constant 0 : i32
    return %arg0, %c0_i32 : i32, i32
  }
  func.func @transform_3(%arg0: i32) -> (i32, i32) {
    %c0_i32 = arith.constant 0 : i32
    %c0_i32_0 = arith.constant 0 : i32
    return %arg0, %c0_i32 : i32, i32
  }
  func.func @transform_4(%arg0: i32) -> (i32, i32) {
    %c0_i32 = arith.constant 0 : i32
    %c0_i32_0 = arith.constant 0 : i32
    %c0_i32_1 = arith.constant 0 : i32
    return %c0_i32, %c0_i32_0 : i32, i32
  }
  func.func @transform_5(%arg0: i32) -> (i32, i32) {
    %c0_i32 = arith.constant 0 : i32
    %c0_i32_0 = arith.constant 0 : i32
    %c0_i32_1 = arith.constant 0 : i32
    return %c0_i32, %c0_i32_0 : i32, i32
  }
  func.func @transform_6(%arg0: i32) -> (i32, i32) {
    %c0_i32 = arith.constant 0 : i32
    %c0_i32_0 = arith.constant 0 : i32
    %c0_i32_1 = arith.constant 0 : i32
    return %c0_i32, %c0_i32_0 : i32, i32
  }
  func.func @transform_7(%arg0: i32) -> (i32, i32) {
    %c0_i32 = arith.constant 0 : i32
    %c0_i32_0 = arith.constant 0 : i32
    %c0_i32_1 = arith.constant 0 : i32
    return %c0_i32, %c0_i32_0 : i32, i32
  }
  func.func @transform_8(%arg0: i32) -> (i32, i32) {
    %c0_i32 = arith.constant 0 : i32
    %c0_i32_0 = arith.constant 0 : i32
    %c0_i32_1 = arith.constant 0 : i32
    return %c0_i32, %c0_i32_0 : i32, i32
  }
  func.func @transform_9(%arg0: i32) -> (i32, i32) {
    %c0_i32 = arith.constant 0 : i32
    %c0_i32_0 = arith.constant 0 : i32
    %c0_i32_1 = arith.constant 0 : i32
    return %c0_i32, %c0_i32_0 : i32, i32
  }
  func.func @transform_10(%arg0: i32) -> (i32, i32) {
    %c0_i32 = arith.constant 0 : i32
    %c0_i32_0 = arith.constant 0 : i32
    %c0_i32_1 = arith.constant 0 : i32
    return %c0_i32, %c0_i32_0 : i32, i32
  }
  func.func @transform_11(%arg0: i32) -> (i32, i32) {
    %c0_i32 = arith.constant 0 : i32
    %c0_i32_0 = arith.constant 0 : i32
    %c0_i32_1 = arith.constant 0 : i32
    return %c0_i32, %c0_i32_0 : i32, i32
  }
  func.func @transform_12(%arg0: i32) -> (i32, i32) {
    %c0_i32 = arith.constant 0 : i32
    %c0_i32_0 = arith.constant 0 : i32
    %c0_i32_1 = arith.constant 0 : i32
    return %c0_i32, %c0_i32_0 : i32, i32
  }
}

</mosaic_0001>

<llo_original>
// kernel: tpu_custom_call.1
$region0: #{tpu_custom_call.1}
  #allocation0 [shape = 'u32[]', space=smem, size = 0x4, offset = 0x4, fixed_abs, tag = 'smem constant byte address 0x4 - core index']
  #allocation1 [shape = 'u32[72,128]{1,0:T(1,128)}', space=vmem, size = 0x9000, scoped, tag = 'internal scratch']
  #allocation2 [shape = 'bf16[8,32]{1,0:T(8,128)(2,1)}', space=vmem, size = 0x800, scoped, tag = 'scratch operand']
  #allocation3 [shape = 'f32[1,32]{1,0:T(1,128)}', space=vmem, size = 0x200, scoped, tag = 'scratch operand']
  #allocation4 [shape = 'f32[8,64]{1,0:T(8,128)}', space=vmem, size = 0x1000, scoped, tag = 'scratch operand']
  %s0 = inlined_call_operand.vmem [shape: f32[8,4], index: 0, kind: input, shape index: {}]
  %s1 = inlined_call_operand.vmem [shape: f32[16,2], index: 1, kind: input, shape index: {}]
  %s2 = inlined_call_operand.vmem [shape: s32[16,1], index: 2, kind: input, shape index: {}]
  %s3 = inlined_call_operand.vmem [shape: s32[16,1], index: 3, kind: input, shape index: {}]
  %s4 = inlined_call_operand.vmem [shape: f32[4,32], index: 4, kind: input, shape index: {}]
  %s5 = inlined_call_operand.vmem [shape: f32[4,32], index: 5, kind: input, shape index: {}]
  %s6 = inlined_call_operand.vmem [shape: f32[2,32], index: 6, kind: input, shape index: {}]
  %s7 = inlined_call_operand.vmem [shape: f32[32,64], index: 7, kind: input, shape index: {}]
  %s8 = inlined_call_operand.vmem [shape: f32[1,64], index: 8, kind: input, shape index: {}]
  %s9 = inlined_call_operand.vmem [shape: f32[64,32], index: 9, kind: input, shape index: {}]
  %s10 = inlined_call_operand.vmem [shape: f32[1,32], index: 10, kind: input, shape index: {}]
  %s11 = inlined_call_operand.vmem [shape: f32[1,32], index: 11, kind: input, shape index: {}]
  %s12 = inlined_call_operand.hbm [shape: f32[8,32], index: 12, kind: output, shape index: {}]
  %s13 = sld [smem:[#allocation0]]
  $region93: #{tpu_custom_call.1} parent=0
    _
  %s15 = ssub.s32 1, %s13
  %s16 = scalar_select 0, %s15, %s13
  $region1: #{tpu_custom_call.1} parent=0
    #allocation5 [shape = 'u8[4096]{0}', space=vmem, size = 0x1000, scoped, tag = 'output window, operand 0, single buffered']
    #allocation6 [shape = 's32[2]{0}', space=sflag, size = 0x8, scoped, tag = 'scoped memory for tpu_custom_call.1']
    %17 = vsyncpa [#allocation6], 0
    loop: start=0, step=1, limit=4
    $region2: #{tpu_custom_call.1} parent=1 // loop_pre_header
      _
    $region3: #{tpu_custom_call.1} parent=1 // loop_header
      %s19 = sphi 0, %s23
      %p20 = scmp.ge.s32.totalorder %s19, 4
      %s27 = sphi 0, %s27
      %s29 = sphi 0, %s27
      %s30 = sphi 0, %s29
      %s44 = sphi 0, %s30
      %s50 = sphi 0, %s52
      %s53 = sphi 0, %s50
      %s54 = sphi 0, %s53
      %s70 = sphi 0, %s54
      %s76 = sphi 0, %s78
      %s79 = sphi 0, %s76
      %s80 = sphi 0, %s79
      %s96 = sphi 0, %s80
      %s102 = sphi 0, %s104
      %s105 = sphi 0, %s102
      %s106 = sphi 0, %s105
      %s122 = sphi 0, %s106
      %s126 = sphi 0, %s126
      %s128 = sphi 0, %s126
      %s129 = sphi 0, %s128
      %s143 = sphi 0, %s129
      %s147 = sphi 0, %s147
      %s149 = sphi 0, %s147
      %s150 = sphi 0, %s149
      %s164 = sphi 0, %s150
      %s168 = sphi 0, %s168
      %s170 = sphi 0, %s168
      %s171 = sphi 0, %s170
      %s185 = sphi 0, %s171
      %s189 = sphi 0, %s189
      %s191 = sphi 0, %s189
      %s192 = sphi 0, %s191
      %s206 = sphi 0, %s192
      %s210 = sphi 0, %s210
      %s212 = sphi 0, %s210
      %s213 = sphi 0, %s212
      %s227 = sphi 0, %s213
      %s231 = sphi 0, %s231
      %s233 = sphi 0, %s231
      %s234 = sphi 0, %s233
      %s248 = sphi 0, %s234
      %s252 = sphi 0, %s252
      %s254 = sphi 0, %s252
      %s255 = sphi 0, %s254
      %s269 = sphi 0, %s255
      %s273 = sphi 0, %s273
      %s275 = sphi 0, %s273
      %s276 = sphi 0, %s275
      %s290 = sphi 0, %s276
      %s294 = sphi 0, %s294
      %s296 = sphi 0, %s294
      %s297 = sphi 0, %s296
      %s311 = sphi 0, %s297
    $region4: #{tpu_custom_call.1} parent=1 // loop_header_branch
      %22 = sbr.rel (%p20) target = $region8
    $region5: #{tpu_custom_call.1} parent=1 // loop_body
      %s24 = ssub.s32 %s19, 1
      %s25 = ssub.s32 %s19, 2
      %s26 = sadd.s32 %s19, 1
      %s28 = sadd.s32 %s27, 1
      %p31 = scmp.eq.s32.totalorder %s19, 1
      %p32 = scmp.ne.s32.totalorder %s27, %s29
      %p33 = scmp.eq.s32.totalorder %s19, 0
      %p34 = por %p32, %p33
      %p35 = scmp.ne.s32.totalorder %s27, %s29
      %p36 = scmp.eq.s32.totalorder %s24, 1
      %p37 = por %p35, %p36
      %p38 = scmp.ne.s32.totalorder %s29, %s30
      %p39 = scmp.eq.s32.totalorder %s24, 0
      %p40 = por %p38, %p39
      %p41 = scmp.ne.s32.totalorder %s29, %s30
      %p42 = scmp.eq.s32.totalorder %s25, 1
      %p43 = por %p41, %p42
      %p45 = scmp.ne.s32.totalorder %s30, %s44
      %p46 = scmp.eq.s32.totalorder %s25, 0
      %p47 = por %p45, %p46
      %s48 = ssub.s32 %s19, %s26
      %p49 = scmp.eq.s32.totalorder %s48, 0
      %s51 = sadd.s32 %s50, 1
      %s52 = scalar_select %p49, %s50, %s51
      %p55 = pneg %p49
      %p56 = scmp.eq.s32.totalorder %s19, 1
      %p57 = por %p55, %p56
      %p58 = scmp.ne.s32.totalorder %s50, %s53
      %p59 = scmp.eq.s32.totalorder %s19, 0
      %p60 = por %p58, %p59
      %p61 = scmp.ne.s32.totalorder %s50, %s53
      %p62 = scmp.eq.s32.totalorder %s24, 1
      %p63 = por %p61, %p62
      %p64 = scmp.ne.s32.totalorder %s53, %s54
      %p65 = scmp.eq.s32.totalorder %s24, 0
      %p66 = por %p64, %p65
      %p67 = scmp.ne.s32.totalorder %s53, %s54
      %p68 = scmp.eq.s32.totalorder %s25, 1
      %p69 = por %p67, %p68
      %p71 = scmp.ne.s32.totalorder %s54, %s70
      %p72 = scmp.eq.s32.totalorder %s25, 0
      %p73 = por %p71, %p72
      %s74 = ssub.s32 %s19, %s26
      %p75 = scmp.eq.s32.totalorder %s74, 0
      %s77 = sadd.s32 %s76, 1
      %s78 = scalar_select %p75, %s76, %s77
      %p81 = pneg %p75
      %p82 = scmp.eq.s32.totalorder %s19, 1
      %p83 = por %p81, %p82
      %p84 = scmp.ne.s32.totalorder %s76, %s79
      %p85 = scmp.eq.s32.totalorder %s19, 0
      %p86 = por %p84, %p85
      %p87 = scmp.ne.s32.totalorder %s76, %s79
      %p88 = scmp.eq.s32.totalorder %s24, 1
      %p89 = por %p87, %p88
      %p90 = scmp.ne.s32.totalorder %s79, %s80
      %p91 = scmp.eq.s32.totalorder %s24, 0
      %p92 = por %p90, %p91
      %p93 = scmp.ne.s32.totalorder %s79, %s80
      %p94 = scmp.eq.s32.totalorder %s25, 1
      %p95 = por %p93, %p94
      %p97 = scmp.ne.s32.totalorder %s80, %s96
      %p98 = scmp.eq.s32.totalorder %s25, 0
      %p99 = por %p97, %p98
      %s100 = ssub.s32 %s19, %s26
      %p101 = scmp.eq.s32.totalorder %s100, 0
      %s103 = sadd.s32 %s102, 1
      %s104 = scalar_select %p101, %s102, %s103
      %p107 = pneg %p101
      %p108 = scmp.eq.s32.totalorder %s19, 1
      %p109 = por %p107, %p108
      %p110 = scmp.ne.s32.totalorder %s102, %s105
      %p111 = scmp.eq.s32.totalorder %s19, 0
      %p112 = por %p110, %p111
      %p113 = scmp.ne.s32.totalorder %s102, %s105
      %p114 = scmp.eq.s32.totalorder %s24, 1
      %p115 = por %p113, %p114
      %p116 = scmp.ne.s32.totalorder %s105, %s106
      %p117 = scmp.eq.s32.totalorder %s24, 0
      %p118 = por %p116, %p117
      %p119 = scmp.ne.s32.totalorder %s105, %s106
      %p120 = scmp.eq.s32.totalorder %s25, 1
      %p121 = por %p119, %p120
      %p123 = scmp.ne.s32.totalorder %s106, %s122
      %p124 = scmp.eq.s32.totalorder %s25, 0
      %p125 = por %p123, %p124
      %s127 = sadd.s32 %s126, 1
      %p130 = scmp.eq.s32.totalorder %s19, 1
      %p131 = scmp.ne.s32.totalorder %s126, %s128
      %p132 = scmp.eq.s32.totalorder %s19, 0
      %p133 = por %p131, %p132
      %p134 = scmp.ne.s32.totalorder %s126, %s128
      %p135 = scmp.eq.s32.totalorder %s24, 1
      %p136 = por %p134, %p135
      %p137 = scmp.ne.s32.totalorder %s128, %s129
      %p138 = scmp.eq.s32.totalorder %s24, 0
      %p139 = por %p137, %p138
      %p140 = scmp.ne.s32.totalorder %s128, %s129
      %p141 = scmp.eq.s32.totalorder %s25, 1
      %p142 = por %p140, %p141
      %p144 = scmp.ne.s32.totalorder %s129, %s143
      %p145 = scmp.eq.s32.totalorder %s25, 0
      %p146 = por %p144, %p145
      %s148 = sadd.s32 %s147, 1
      %p151 = scmp.eq.s32.totalorder %s19, 1
      %p152 = scmp.ne.s32.totalorder %s147, %s149
      %p153 = scmp.eq.s32.totalorder %s19, 0
      %p154 = por %p152, %p153
      %p155 = scmp.ne.s32.totalorder %s147, %s149
      %p156 = scmp.eq.s32.totalorder %s24, 1
      %p157 = por %p155, %p156
      %p158 = scmp.ne.s32.totalorder %s149, %s150
      %p159 = scmp.eq.s32.totalorder %s24, 0
      %p160 = por %p158, %p159
      %p161 = scmp.ne.s32.totalorder %s149, %s150
      %p162 = scmp.eq.s32.totalorder %s25, 1
      %p163 = por %p161, %p162
      %p165 = scmp.ne.s32.totalorder %s150, %s164
      %p166 = scmp.eq.s32.totalorder %s25, 0
      %p167 = por %p165, %p166
      %s169 = sadd.s32 %s168, 1
      %p172 = scmp.eq.s32.totalorder %s19, 1
      %p173 = scmp.ne.s32.totalorder %s168, %s170
      %p174 = scmp.eq.s32.totalorder %s19, 0
      %p175 = por %p173, %p174
      %p176 = scmp.ne.s32.totalorder %s168, %s170
      %p177 = scmp.eq.s32.totalorder %s24, 1
      %p178 = por %p176, %p177
      %p179 = scmp.ne.s32.totalorder %s170, %s171
      %p180 = scmp.eq.s32.totalorder %s24, 0
      %p181 = por %p179, %p180
      %p182 = scmp.ne.s32.totalorder %s170, %s171
      %p183 = scmp.eq.s32.totalorder %s25, 1
      %p184 = por %p182, %p183
      %p186 = scmp.ne.s32.totalorder %s171, %s185
      %p187 = scmp.eq.s32.totalorder %s25, 0
      %p188 = por %p186, %p187
      %s190 = sadd.s32 %s189, 1
      %p193 = scmp.eq.s32.totalorder %s19, 1
      %p194 = scmp.ne.s32.totalorder %s189, %s191
      %p195 = scmp.eq.s32.totalorder %s19, 0
      %p196 = por %p194, %p195
      %p197 = scmp.ne.s32.totalorder %s189, %s191
      %p198 = scmp.eq.s32.totalorder %s24, 1
      %p199 = por %p197, %p198
      %p200 = scmp.ne.s32.totalorder %s191, %s192
      %p201 = scmp.eq.s32.totalorder %s24, 0
      %p202 = por %p200, %p201
      %p203 = scmp.ne.s32.totalorder %s191, %s192
      %p204 = scmp.eq.s32.totalorder %s25, 1
      %p205 = por %p203, %p204
      %p207 = scmp.ne.s32.totalorder %s192, %s206
      %p208 = scmp.eq.s32.totalorder %s25, 0
      %p209 = por %p207, %p208
      %s211 = sadd.s32 %s210, 1
      %p214 = scmp.eq.s32.totalorder %s19, 1
      %p215 = scmp.ne.s32.totalorder %s210, %s212
      %p216 = scmp.eq.s32.totalorder %s19, 0
      %p217 = por %p215, %p216
      %p218 = scmp.ne.s32.totalorder %s210, %s212
      %p219 = scmp.eq.s32.totalorder %s24, 1
      %p220 = por %p218, %p219
      %p221 = scmp.ne.s32.totalorder %s212, %s213
      %p222 = scmp.eq.s32.totalorder %s24, 0
      %p223 = por %p221, %p222
      %p224 = scmp.ne.s32.totalorder %s212, %s213
      %p225 = scmp.eq.s32.totalorder %s25, 1
      %p226 = por %p224, %p225
      %p228 = scmp.ne.s32.totalorder %s213, %s227
      %p229 = scmp.eq.s32.totalorder %s25, 0
      %p230 = por %p228, %p229
      %s232 = sadd.s32 %s231, 1
      %p235 = scmp.eq.s32.totalorder %s19, 1
      %p236 = scmp.ne.s32.totalorder %s231, %s233
      %p237 = scmp.eq.s32.totalorder %s19, 0
      %p238 = por %p236, %p237
      %p239 = scmp.ne.s32.totalorder %s231, %s233
      %p240 = scmp.eq.s32.totalorder %s24, 1
      %p241 = por %p239, %p240
      %p242 = scmp.ne.s32.totalorder %s233, %s234
      %p243 = scmp.eq.s32.totalorder %s24, 0
      %p244 = por %p242, %p243
      %p245 = scmp.ne.s32.totalorder %s233, %s234
      %p246 = scmp.eq.s32.totalorder %s25, 1
      %p247 = por %p245, %p246
      %p249 = scmp.ne.s32.totalorder %s234, %s248
      %p250 = scmp.eq.s32.totalorder %s25, 0
      %p251 = por %p249, %p250
      %s253 = sadd.s32 %s252, 1
      %p256 = scmp.eq.s32.totalorder %s19, 1
      %p257 = scmp.ne.s32.totalorder %s252, %s254
      %p258 = scmp.eq.s32.totalorder %s19, 0
      %p259 = por %p257, %p258
      %p260 = scmp.ne.s32.totalorder %s252, %s254
      %p261 = scmp.eq.s32.totalorder %s24, 1
      %p262 = por %p260, %p261
      %p263 = scmp.ne.s32.totalorder %s254, %s255
      %p264 = scmp.eq.s32.totalorder %s24, 0
      %p265 = por %p263, %p264
      %p266 = scmp.ne.s32.totalorder %s254, %s255
      %p267 = scmp.eq.s32.totalorder %s25, 1
      %p268 = por %p266, %p267
      %p270 = scmp.ne.s32.totalorder %s255, %s269
      %p271 = scmp.eq.s32.totalorder %s25, 0
      %p272 = por %p270, %p271
      %s274 = sadd.s32 %s273, 1
      %p277 = scmp.eq.s32.totalorder %s19, 1
      %p278 = scmp.ne.s32.totalorder %s273, %s275
      %p279 = scmp.eq.s32.totalorder %s19, 0
      %p280 = por %p278, %p279
      %p281 = scmp.ne.s32.totalorder %s273, %s275
      %p282 = scmp.eq.s32.totalorder %s24, 1
      %p283 = por %p281, %p282
      %p284 = scmp.ne.s32.totalorder %s275, %s276
      %p285 = scmp.eq.s32.totalorder %s24, 0
      %p286 = por %p284, %p285
      %p287 = scmp.ne.s32.totalorder %s275, %s276
      %p288 = scmp.eq.s32.totalorder %s25, 1
      %p289 = por %p287, %p288
      %p291 = scmp.ne.s32.totalorder %s276, %s290
      %p292 = scmp.eq.s32.totalorder %s25, 0
      %p293 = por %p291, %p292
      %s295 = sadd.s32 %s294, 1
      %p298 = scmp.eq.s32.totalorder %s19, 1
      %p299 = scmp.ne.s32.totalorder %s294, %s296
      %p300 = scmp.eq.s32.totalorder %s19, 0
      %p301 = por %p299, %p300
      %p302 = scmp.ne.s32.totalorder %s294, %s296
      %p303 = scmp.eq.s32.totalorder %s24, 1
      %p304 = por %p302, %p303
      %p305 = scmp.ne.s32.totalorder %s296, %s297
      %p306 = scmp.eq.s32.totalorder %s24, 0
      %p307 = por %p305, %p306
      %p308 = scmp.ne.s32.totalorder %s296, %s297
      %p309 = scmp.eq.s32.totalorder %s25, 1
      %p310 = por %p308, %p309
      %p312 = scmp.ne.s32.totalorder %s297, %s311
      %p313 = scmp.eq.s32.totalorder %s25, 0
      %p314 = por %p312, %p313
      %p315 = scmp.le.s32.totalorder 1, %s19
      %p316 = scmp.lt.s32.totalorder %s19, 3
      %p317 = pnand %p315, %p316
      %p318 = pneg %p317
      // Predicated region
      $region9: #{tpu_custom_call.1} parent=5 // pred_check
        _
      $region10: #{tpu_custom_call.1} parent=5 // pred_check_branch
        %320 = sbr.rel (%p317) target = $region12
      $region11: #{tpu_custom_call.1} parent=5 // pred_region
        %s321 = ssub.s32 %s19, 1
        // Predicated region
        $region13: #{tpu_custom_call.1} parent=11 // pred_check
          %p322 = pneg %p40
        $region14: #{tpu_custom_call.1} parent=11 // pred_check_branch
          %324 = sbr.rel (%p322) target = $region16
        $region15: #{tpu_custom_call.1} parent=11 // pred_region
          _
        $region16: #{tpu_custom_call.1} parent=11 // pred_fallthru
          _
        // Predicated region
        $region17: #{tpu_custom_call.1} parent=11 // pred_check
          %p325 = pneg %p139
        $region18: #{tpu_custom_call.1} parent=11 // pred_check_branch
          %327 = sbr.rel (%p325) target = $region20
        $region19: #{tpu_custom_call.1} parent=11 // pred_region
          _
        $region20: #{tpu_custom_call.1} parent=11 // pred_fallthru
          _
        // Predicated region
        $region21: #{tpu_custom_call.1} parent=11 // pred_check
          %p328 = pneg %p160
        $region22: #{tpu_custom_call.1} parent=11 // pred_check_branch
          %330 = sbr.rel (%p328) target = $region24
        $region23: #{tpu_custom_call.1} parent=11 // pred_region
          _
        $region24: #{tpu_custom_call.1} parent=11 // pred_fallthru
          _
        // Predicated region
        $region25: #{tpu_custom_call.1} parent=11 // pred_check
          %p331 = pneg %p181
        $region26: #{tpu_custom_call.1} parent=11 // pred_check_branch
          %333 = sbr.rel (%p331) target = $region28
        $region27: #{tpu_custom_call.1} parent=11 // pred_region
          _
        $region28: #{tpu_custom_call.1} parent=11 // pred_fallthru
          _
        // Predicated region
        $region29: #{tpu_custom_call.1} parent=11 // pred_check
          %p334 = pneg %p202
        $region30: #{tpu_custom_call.1} parent=11 // pred_check_branch
          %336 = sbr.rel (%p334) target = $region32
        $region31: #{tpu_custom_call.1} parent=11 // pred_region
          _
        $region32: #{tpu_custom_call.1} parent=11 // pred_fallthru
          _
        // Predicated region
        $region33: #{tpu_custom_call.1} parent=11 // pred_check
          %p337 = pneg %p223
        $region34: #{tpu_custom_call.1} parent=11 // pred_check_branch
          %339 = sbr.rel (%p337) target = $region36
        $region35: #{tpu_custom_call.1} parent=11 // pred_region
          _
        $region36: #{tpu_custom_call.1} parent=11 // pred_fallthru
          _
        // Predicated region
        $region37: #{tpu_custom_call.1} parent=11 // pred_check
          %p340 = pneg %p244
        $region38: #{tpu_custom_call.1} parent=11 // pred_check_branch
          %342 = sbr.rel (%p340) target = $region40
        $region39: #{tpu_custom_call.1} parent=11 // pred_region
          _
        $region40: #{tpu_custom_call.1} parent=11 // pred_fallthru
          _
        // Predicated region
        $region41: #{tpu_custom_call.1} parent=11 // pred_check
          %p343 = pneg %p265
        $region42: #{tpu_custom_call.1} parent=11 // pred_check_branch
          %345 = sbr.rel (%p343) target = $region44
        $region43: #{tpu_custom_call.1} parent=11 // pred_region
          _
        $region44: #{tpu_custom_call.1} parent=11 // pred_fallthru
          _
        // Predicated region
        $region45: #{tpu_custom_call.1} parent=11 // pred_check
          %p346 = pneg %p286
        $region46: #{tpu_custom_call.1} parent=11 // pred_check_branch
          %348 = sbr.rel (%p346) target = $region48
        $region47: #{tpu_custom_call.1} parent=11 // pred_region
          _
        $region48: #{tpu_custom_call.1} parent=11 // pred_fallthru
          _
      $region12: #{tpu_custom_call.1} parent=5 // pred_fallthru
        _
      %p349 = scmp.lt.s32.totalorder %s19, 2
      // Predicated region
      $region49: #{tpu_custom_call.1} parent=5 // pred_check
        %p350 = pneg %p349
      $region50: #{tpu_custom_call.1} parent=5 // pred_check_branch
        %352 = sbr.rel (%p350) target = $region52
      $region51: #{tpu_custom_call.1} parent=5 // pred_region
        // Predicated region
        $region53: #{tpu_custom_call.1} parent=51 // pred_check
          %p353 = pneg %p60
        $region54: #{tpu_custom_call.1} parent=51 // pred_check_branch
          %355 = sbr.rel (%p353) target = $region56
        $region55: #{tpu_custom_call.1} parent=51 // pred_region
          %p356 = scmp.lt.s32.totalorder %s19, 1
          %s357 = scalar_select %p356, %s19, 1
          %s358 = smul.addr %s357, 8
          %s359 = scalar_lea.vmem %s1, %s358
        $region56: #{tpu_custom_call.1} parent=51 // pred_fallthru
          _
        // Predicated region
        $region57: #{tpu_custom_call.1} parent=51 // pred_check
          %p360 = pneg %p86
        $region58: #{tpu_custom_call.1} parent=51 // pred_check_branch
          %362 = sbr.rel (%p360) target = $region60
        $region59: #{tpu_custom_call.1} parent=51 // pred_region
          %p363 = scmp.lt.s32.totalorder %s19, 1
          %s364 = scalar_select %p363, %s19, 1
          %s365 = smul.addr %s364, 8
          %s366 = scalar_lea.vmem %s2, %s365
        $region60: #{tpu_custom_call.1} parent=51 // pred_fallthru
          _
        // Predicated region
        $region61: #{tpu_custom_call.1} parent=51 // pred_check
          %p367 = pneg %p112
        $region62: #{tpu_custom_call.1} parent=51 // pred_check_branch
          %369 = sbr.rel (%p367) target = $region64
        $region63: #{tpu_custom_call.1} parent=51 // pred_region
          %p370 = scmp.lt.s32.totalorder %s19, 1
          %s371 = scalar_select %p370, %s19, 1
          %s372 = smul.addr %s371, 8
          %s373 = scalar_lea.vmem %s3, %s372
        $region64: #{tpu_custom_call.1} parent=51 // pred_fallthru
          _
      $region52: #{tpu_custom_call.1} parent=5 // pred_fallthru
        _
      %p374 = scmp.le.s32.totalorder 1, %s19
      %p375 = scmp.lt.s32.totalorder %s19, 3
      %p376 = pnand %p374, %p375
      %p377 = pneg %p376
      // Predicated region
      $region65: #{tpu_custom_call.1} parent=5 // pred_check
        _
      $region66: #{tpu_custom_call.1} parent=5 // pred_check_branch
        %379 = sbr.rel (%p376) target = $region68
      $region67: #{tpu_custom_call.1} parent=5 // pred_region
        %s380 = ssub.s32 %s19, 1
        %p381 = pneg %p40
        %p382 = pneg %p37
        %p383 = scmp.lt.s32.totalorder %s24, 1
        %s384 = scalar_select %p383, %s24, 1
        %s385 = smul.addr %s384, 8
        %s386 = scalar_lea.vmem %s1, %s385
        %p387 = pneg %p66
        %p388 = pneg %p63
        %p389 = scmp.lt.s32.totalorder %s24, 1
        %s390 = scalar_select %p389, %s24, 1
        %s391 = smul.addr %s390, 8
        %s392 = scalar_lea.vmem %s2, %s391
        %p393 = pneg %p92
        %p394 = pneg %p89
        %p395 = scmp.lt.s32.totalorder %s24, 1
        %s396 = scalar_select %p395, %s24, 1
        %s397 = smul.addr %s396, 8
        %s398 = scalar_lea.vmem %s3, %s397
        %p399 = pneg %p118
        %p400 = pneg %p115
        %p401 = pneg %p139
        %p402 = pneg %p136
        %p403 = pneg %p160
        %p404 = pneg %p157
        %p405 = pneg %p181
        %p406 = pneg %p178
        %p407 = pneg %p202
        %p408 = pneg %p199
        %p409 = pneg %p223
        %p410 = pneg %p220
        %p411 = pneg %p244
        %p412 = pneg %p241
        %p413 = pneg %p265
        %p414 = pneg %p262
        %p415 = pneg %p286
        %p416 = pneg %p283
        %p417 = pneg %p307
        %p418 = pneg %p304
        %p419 = scmp.lt.s32.totalorder %s24, 1
        %s420 = scalar_select %p419, %s24, 1
        %s421 = smul.addr %s420, 8
        %s422 = scalar_lea.vmem %s1, %s421
        %p423 = scmp.lt.s32.totalorder %s24, 1
        %s424 = scalar_select %p423, %s24, 1
        %s425 = smul.addr %s424, 8
        %s426 = scalar_lea.vmem %s2, %s425
        %p427 = scmp.lt.s32.totalorder %s24, 1
        %s428 = scalar_select %p427, %s24, 1
        %s429 = smul.addr %s428, 8
        %s430 = scalar_lea.vmem %s3, %s429
        %p432 = scmp.eq.s32.totalorder %s24, 0
        // Predicated region
        $region69: #{tpu_custom_call.1} parent=67 // pred_check
          %p433 = pneg %p432
        $region70: #{tpu_custom_call.1} parent=67 // pred_check_branch
          %435 = sbr.rel (%p433) target = $region72
        $region71: #{tpu_custom_call.1} parent=67 // pred_region
          %v436 = vld [vmem:[%s0] sm:$0xff]
          %v437 = vld [vmem:[%s4] sm:$0xf]
          %vm438 = vcmask 31744
          %v440 = vsel %vm438, %v436, 0
          %vm442 = vcmask 1043456
          %v444 = vsel %vm442, %v437, 0
          %446 = vmatpush.msra.mxu0 0.0
          %447 = vmatpush.msra.mxu0 0.0
          %448 = vmatpush.msra.mxu0 0.0
          %449 = vmatpush.msra.mxu0 0.0
          %450 = vmatpush.msra.mxu0 0.0
          %451 = vmatpush.msra.mxu0 0.0
          %452 = vmatpush.msra.mxu0 0.0
          %453 = vmatpush.msra.mxu0 0.0
          %454 = vmatpush.msra.mxu0 0.0
          %455 = vmatpush.msra.mxu0 0.0
          %456 = vmatpush.msra.mxu0 0.0
          %457 = vmatpush.msra.mxu0 0.0
          %458 = vmatpush.msra.mxu0 0.0
          %459 = vmatpush.msra.mxu0 0.0
          %460 = vmatpush.msra.mxu0 0.0
          %461 = vmatpush.msra.mxu0 %v444
          %462 = vmatmul.f32.gmra.mxu0 %v440
          %v463 = vpop.f32.mrf.mxu0
          %v464 = vadd.f32 0.0, %v463
          %465 = vdwg.mxu0
          %v466 = vpack.c.bf16 %v464, %v464
          %vm467 = vcmask 257024
          %468 = vst.msk [vmem:[#allocation2] sm:$0xf] %vm467, %v466
          %vm469 = vcmask 253952
          %470 = vst.msk [vmem:[#allocation3] sm:$0x1] %vm469, -inf
          %vm471 = vcmask 523264
          %472 = vst.msk [vmem:[#allocation4] sm:$0xff] %vm471, 0.0
        $region72: #{tpu_custom_call.1} parent=67 // pred_fallthru
          _
        %v473 = vlaneseq
        %v474 = vand.u32 %v473, 127
        %v475 = vld [vmem:[%s426] sm:$0xff]
        %476 = vset.pattern.permute.xlu0 0
        %477 = vperm.xlu0 %476, %v475
        %v478 = vpop.permute.xlu0 %477
        %vm479 = vcmp.eq.s32.totalorder %v478, %v474
        %v480 = vsel %vm479, 1, 0
        %v481 = vcvt.s32.f32 %v480
        %v482 = vpack.c.bf16 %v481, %v481
        %v483 = vld [vmem:[%s430] sm:$0xff]
        %484 = vset.pattern.permute.xlu0 0
        %485 = vperm.xlu0 %484, %v483
        %v486 = vpop.permute.xlu0 %485
        %vm487 = vcmp.eq.s32.totalorder %v486, %v474
        %v488 = vsel %vm487, 1, 0
        %v489 = vcvt.s32.f32 %v488
        %v490 = vpack.c.bf16 %v489, %v489
        %v491 = vld [vmem:[%s422] sm:$0xff]
        %v492 = vld [vmem:[%s6] sm:$0x3]
        %494 = vset.pattern.permute.xlu0 0
        %495 = vperm.xlu0 %494, %v491
        %v496 = vpop.permute.xlu0 %495
        %v498 = vperm.slane %v492, 0
        %v499 = vmul.f32 %v496, %v498
        %500 = vset.pattern.permute.xlu0 1
        %501 = vperm.xlu0 %500, %v491
        %v502 = vpop.permute.xlu0 %501
        %v504 = vperm.slane %v492, 1
        %v505 = vmul.f32 %v502, %v504
        %v506 = vadd.f32 %v499, %v505
        %v507 = vld [vmem:[#allocation2] sm:$0xf]
        %vm508 = vcmask 64512
        %v510 = vsel %vm508, %v482, 0
        %vm512 = vcmask 1043456
        %v514 = vsel %vm512, %v507, 0
        %516 = vmatpush.bf16.msra.mxu0 0
        %517 = vmatpush.bf16.msra.mxu0 0
        %518 = vmatpush.bf16.msra.mxu0 0
        %519 = vmatpush.bf16.msra.mxu0 0
        %520 = vmatpush.bf16.msra.mxu0 0
        %521 = vmatpush.bf16.msra.mxu0 0
        %522 = vmatpush.bf16.msra.mxu0 0
        %523 = vmatpush.bf16.msra.mxu0 %v514
        %524 = vmatmul.bf16.gmra.mxu0 %v510
        %v525 = vpop.f32.mrf.mxu0
        %v526 = vadd.f32 %v506, %v525
        %v527 = vpop.f32.mrf.mxu0
        %528 = vdwg.mxu0
        %v529 = vmax.f32 %v526, 0.0
        %v530 = vadd.f32 %v529, 1e-07
        %v531 = vld [vmem:[#allocation3] sm:$0x1]
        %vm532 = vcmask 261120
        %v533 = vsel %vm532, %v530, -inf
        %v534 = vrot.slane %v533, 4
        %v535 = vmax.f32 %v533, %v534
        %v536 = vrot.slane %v535, 2
        %v537 = vmax.f32 %v535, %v536
        %v538 = vrot.slane %v537, 1
        %v539 = vmax.f32 %v537, %v538
        %v540 = vmax.f32 %v531, %v539
        %v542 = vperm.slane %v540, 0
        %v544 = vsub.f32 %v530, %v542
        %v545 = vmul.f32 %v544, 1.442695
        %v546 = vpow.pop %v545
        %v547 = vmul.f32 %v546, %v530
        %549 = vrot.lane.b32.xlu0 %v546, 32
        %v550 = vpop.permute.xlu0 %549
        %v552 = vsel %vm532, %v547, %v550
        %v553 = vpack.c.bf16 %v552, %v552
        %554 = vxpose.xlu0.c.b16.start [1/8] %v490, 128
        %555 = vxpose.xlu0.c.b16.cont [2/8] 0, 128
        %556 = vxpose.xlu0.c.b16.cont [3/8] 0, 128
        %557 = vxpose.xlu0.c.b16.cont [4/8] 0, 128
        %558 = vxpose.xlu0.c.b16.cont [5/8] 0, 128
        %559 = vxpose.xlu0.c.b16.cont [6/8] 0, 128
        %560 = vxpose.xlu0.c.b16.cont [7/8] 0, 128
        %561 = vxpose.xlu0.c.b16.end [8/8] 0, 128
        %v562 = vpop.trf.xlu0
        %v563 = vpop.trf.xlu0
        %v564 = vpop.trf.xlu0
        %v565 = vpop.trf.xlu0
        %v566 = vpop.trf.xlu0
        %v567 = vpop.trf.xlu0
        %v568 = vpop.trf.xlu0
        %v569 = vpop.trf.xlu0
        %v571 = vsel %vm508, %v562, 0
        %v574 = vsel %vm512, %v553, 0
        %576 = vmatpush.bf16.msra.mxu0 0
        %577 = vmatpush.bf16.msra.mxu0 0
        %578 = vmatpush.bf16.msra.mxu0 0
        %579 = vmatpush.bf16.msra.mxu0 0
        %580 = vmatpush.bf16.msra.mxu0 0
        %581 = vmatpush.bf16.msra.mxu0 0
        %582 = vmatpush.bf16.msra.mxu0 0
        %583 = vmatpush.bf16.msra.mxu0 %v574
        %584 = vmatmul.bf16.gmra.mxu0 %v571
        %v585 = vpop.f32.mrf.mxu0
        %v586 = vadd.f32 0.0, %v585
        %v587 = vpop.f32.mrf.mxu0
        %588 = vdwg.mxu0
        %v589 = vsub.f32 %v539, %v531
        %vm590 = vcmask 253952
        %v591 = vsel %vm590, %v589, -inf
        %592 = vmax.xlane.f32.xlu0 %v591
        %v593 = vpop.xlane.xlu0 %592
        %v594 = vrot.slane %v593, 4
        %v595 = vmax.f32 %v593, %v594
        %v596 = vrot.slane %v595, 2
        %v597 = vmax.f32 %v595, %v596
        %v598 = vrot.slane %v597, 1
        %v599 = vmax.f32 %v597, %v598
        %s600 = vtos %v599
        %p601 = scmp.gt.f32.partialorder %s600, 0.0
        // Predicated region
        $region73: #{tpu_custom_call.1} parent=67 // pred_check
          %p602 = pneg %p601
        $region74: #{tpu_custom_call.1} parent=67 // pred_check_branch
          %604 = sbr.rel (%p602) target = $region76
        $region75: #{tpu_custom_call.1} parent=67 // pred_region
          %v605 = vsub.f32 %v531, %v540
          %v606 = vmul.f32 %v605, 1.442695
          %v607 = vpow.pop %v606
          %v608 = vld [vmem:[#allocation4] sm:$0xff]
          %v610 = vperm.slane %v607, 0
          %611 = vrot.lane.b32.xlu0 %v610, 32
          %v612 = vpop.permute.xlu0 %611
          %v614 = vsel %vm532, %v607, %v612
          %v615 = vperm.slane %v614, 0
          %v616 = vmul.f32 %v608, %v615
          %vm617 = vcmask 523264
          %618 = vst.msk [vmem:[#allocation4] sm:$0xff] %vm617, %v616
        $region76: #{tpu_custom_call.1} parent=67 // pred_fallthru
          _
        %v619 = vld [vmem:[#allocation4] sm:$0xff]
        %v620 = vadd.f32 %v619, %v586
        %vm621 = vcmask 523264
        %622 = vst.msk [vmem:[#allocation4] sm:$0xff] %vm621, %v620
        %623 = vst.msk [vmem:[#allocation3] sm:$0x1] %vm590, %v540
        %p624 = scmp.eq.s32.totalorder %s24, 1
        // Predicated region
        $region77: #{tpu_custom_call.1} parent=67 // pred_check
          %p625 = pneg %p624
        $region78: #{tpu_custom_call.1} parent=67 // pred_check_branch
          %627 = sbr.rel (%p625) target = $region80
        $region79: #{tpu_custom_call.1} parent=67 // pred_region
          %v628 = vld [vmem:[#allocation4] sm:$0xff]
          %v629 = vadd.f32 %v628, 1e-16
          %v630 = vrcp.pop %v629
          %632 = vrot.lane.b32.xlu0 %v630, 96
          %v633 = vpop.permute.xlu0 %632
          %v635 = vmul.f32 %v628, %v633
          %v636 = vld [vmem:[%s0] sm:$0xff]
          %v637 = vld [vmem:[%s5] sm:$0xf]
          %vm638 = vcmask 31744
          %v640 = vsel %vm638, %v636, 0
          %v643 = vsel %vm512, %v637, 0
          %645 = vmatpush.msra.mxu0 0.0
          %646 = vmatpush.msra.mxu0 0.0
          %647 = vmatpush.msra.mxu0 0.0
          %648 = vmatpush.msra.mxu0 0.0
          %649 = vmatpush.msra.mxu0 0.0
          %650 = vmatpush.msra.mxu0 0.0
          %651 = vmatpush.msra.mxu0 0.0
          %652 = vmatpush.msra.mxu0 0.0
          %653 = vmatpush.msra.mxu0 0.0
          %654 = vmatpush.msra.mxu0 0.0
          %655 = vmatpush.msra.mxu0 0.0
          %656 = vmatpush.msra.mxu0 0.0
          %657 = vmatpush.msra.mxu0 0.0
          %658 = vmatpush.msra.mxu0 0.0
          %659 = vmatpush.msra.mxu0 0.0
          %660 = vmatpush.msra.mxu0 %v643
          %661 = vmatmul.f32.gmra.mxu0 %v640
          %v662 = vpop.f32.mrf.mxu0
          %v663 = vadd.f32 0.0, %v662
          %664 = vdwg.mxu0
          %v665 = vadd.f32 %v635, %v663
          %v666 = vld [vmem:[%s7] sm:$0xff]
          %v667 = vld [vmem:[%s7 + $0x8] sm:$0xff]
          %v668 = vld [vmem:[%s7 + $0x10] sm:$0xff]
          %v669 = vld [vmem:[%s7 + $0x18] sm:$0xff]
          %v670 = vld [vmem:[%s8] sm:$0x1]
          %v672 = vperm.slane %v670, 0
          %v675 = vsel %vm532, %v665, 0
          %677 = vmatpush.msra.mxu0 0.0
          %678 = vmatpush.msra.mxu0 0.0
          %679 = vmatpush.msra.mxu0 0.0
          %680 = vmatpush.msra.mxu0 0.0
          %681 = vmatpush.msra.mxu0 0.0
          %682 = vmatpush.msra.mxu0 0.0
          %683 = vmatpush.msra.mxu0 0.0
          %684 = vmatpush.msra.mxu0 0.0
          %685 = vmatpush.msra.mxu0 0.0
          %686 = vmatpush.msra.mxu0 0.0
          %687 = vmatpush.msra.mxu0 0.0
          %688 = vmatpush.msra.mxu0 0.0
          %689 = vmatpush.msra.mxu0 %v669
          %690 = vmatpush.msra.mxu0 %v668
          %691 = vmatpush.msra.mxu0 %v667
          %692 = vmatpush.msra.mxu0 %v666
          %693 = vmatmul.f32.gmra.mxu0 %v675
          %v694 = vpop.f32.mrf.mxu0
          %v695 = vadd.f32 %v672, %v694
          %696 = vdwg.mxu0
          %v697 = vmax.f32 %v695, 0.0
          %v698 = vld [vmem:[%s9] sm:$0xff]
          %v699 = vld [vmem:[%s9 + $0x8] sm:$0xff]
          %v700 = vld [vmem:[%s9 + $0x10] sm:$0xff]
          %v701 = vld [vmem:[%s9 + $0x18] sm:$0xff]
          %v702 = vld [vmem:[%s9 + $0x20] sm:$0xff]
          %v703 = vld [vmem:[%s9 + $0x28] sm:$0xff]
          %v704 = vld [vmem:[%s9 + $0x30] sm:$0xff]
          %v705 = vld [vmem:[%s9 + $0x38] sm:$0xff]
          %v707 = vsel %vm621, %v697, 0
          %709 = vmatpush.msra.mxu0 0.0
          %710 = vmatpush.msra.mxu0 0.0
          %711 = vmatpush.msra.mxu0 0.0
          %712 = vmatpush.msra.mxu0 0.0
          %713 = vmatpush.msra.mxu0 0.0
          %714 = vmatpush.msra.mxu0 0.0
          %715 = vmatpush.msra.mxu0 0.0
          %716 = vmatpush.msra.mxu0 0.0
          %717 = vmatpush.msra.mxu0 %v705
          %718 = vmatpush.msra.mxu0 %v704
          %719 = vmatpush.msra.mxu0 %v703
          %720 = vmatpush.msra.mxu0 %v702
          %721 = vmatpush.msra.mxu0 %v701
          %722 = vmatpush.msra.mxu0 %v700
          %723 = vmatpush.msra.mxu0 %v699
          %724 = vmatpush.msra.mxu0 %v698
          %725 = vmatmul.f32.gmra.mxu0 %v707
          %v726 = vpop.f32.mrf.mxu0
          %v727 = vadd.f32 0.0, %v726
          %728 = vdwg.mxu0
          %v729 = vsel %vm532, %v727, 0.0
          %730 = vadd.xlane.f32.xlu0 %v729
          %v731 = vpop.xlane.xlu0 %730
          %v732 = vrcp.pop 32.0
          %v733 = vmul.f32 32.0, %v732
          %v734 = vsub.f32 1.0, %v733
          %v735 = vmul.f32 %v732, %v734
          %v736 = vadd.f32 %v732, %v735
          %vm737 = vweird.f32 %v732
          %v738 = vsel %vm737, %v732, %v736
          %v739 = vmul.f32 %v731, %v738
          %v740 = vsub.f32 %v727, %v739
          %v741 = vmul.f32 %v740, %v740
          %v742 = vsel %vm532, %v741, 0.0
          %743 = vadd.xlane.f32.xlu0 %v742
          %v744 = vpop.xlane.xlu0 %743
          %v745 = vmul.f32 %v744, %v738
          %v746 = vadd.f32 %v745, 1e-05
          %v747 = vrsqrt.pop %v746
          %v748 = vmul.f32 %v747, %v746
          %v749 = vmul.f32 %v748, %v747
          %v750 = vmul.f32 0.5, %v749
          %v751 = vsub.f32 1.5, %v750
          %v752 = vmul.f32 %v747, %v751
          %vm753 = vweird.f32 %v746
          %vm754 = vweird.f32 %v747
          %vm755 = vmor %vm753, %vm754
          %v756 = vsel %vm755, %v747, %v752
          %v757 = vmul.f32 %v740, %v756
          %v758 = vld [vmem:[%s10] sm:$0x1]
          %v760 = vperm.slane %v758, 0
          %v762 = vmul.f32 %v757, %v760
          %v763 = vld [vmem:[%s11] sm:$0x1]
          %v765 = vperm.slane %v763, 0
          %v767 = vadd.f32 %v762, %v765
          %vm768 = vcmp.gt.f32.partialorder %v767, 0.0
          %v769 = vmul.f32 %v767, 1.442695
          %v770 = vpow.pop %v769
          %v771 = vsub.f32 %v770, 1.0
          %v772 = vsel %vm768, %v767, %v771
          %773 = vst.msk [vmem:[#allocation5] sm:$0xff] %vm532, %v772
        $region80: #{tpu_custom_call.1} parent=67 // pred_fallthru
          _
        // Predicated region
        $region81: #{tpu_custom_call.1} parent=67 // pred_check
          %p774 = pneg %p304
        $region82: #{tpu_custom_call.1} parent=67 // pred_check_branch
          %776 = sbr.rel (%p774) target = $region84
        $region83: #{tpu_custom_call.1} parent=67 // pred_region
          %778 = vsyncadd [#allocation6], 0
          %s780 = sshll.u32 [#allocation5], 4
          %s781 = int_to_ptr.vmem [resolvable:$true] %s780
          %s782 = sshll.u32 %s12, 4
          %s783 = int_to_ptr.hbm [resolvable:$true] %s782
          %785 = dma.vmem_to_hbm [thread:$0]  %s781, 128, %s783, [#allocation6]
        $region84: #{tpu_custom_call.1} parent=67 // pred_fallthru
          _
        // Predicated region
        $region85: #{tpu_custom_call.1} parent=67 // pred_check
          %p786 = pneg %p304
        $region86: #{tpu_custom_call.1} parent=67 // pred_check_branch
          %788 = sbr.rel (%p786) target = $region88
        $region87: #{tpu_custom_call.1} parent=67 // pred_region
          %790 = dma.done [#allocation6], 128
        $region88: #{tpu_custom_call.1} parent=67 // pred_fallthru
          _
      $region68: #{tpu_custom_call.1} parent=5 // pred_fallthru
        _
      %p791 = scmp.le.s32.totalorder 2, %s19
      // Predicated region
      $region89: #{tpu_custom_call.1} parent=5 // pred_check
        %p792 = pneg %p791
      $region90: #{tpu_custom_call.1} parent=5 // pred_check_branch
        %794 = sbr.rel (%p792) target = $region92
      $region91: #{tpu_custom_call.1} parent=5 // pred_region
        %s795 = ssub.s32 %s19, 2
      $region92: #{tpu_custom_call.1} parent=5 // pred_fallthru
        _
    $region6: #{tpu_custom_call.1} parent=1 // loop_footer
      %s23 = sadd.s32 1, %s19
    $region7: #{tpu_custom_call.1} parent=1 // loop_footer_branch
      %18 = sbr.rel target = $region3
    $region8: #{tpu_custom_call.1} parent=1 // loop_exit
      _
    %796 = vsyncpa [#allocation6], 1
    %s797 = scalar_lea.sflag [#allocation6], 1
    %798 = vsyncpa %s797, 1

</llo_original>
